<compile_context>
chip_gen: v7x
topology: tpu7x:2x2x1
jax: 0.10.0
libtpu: 0.0.40
codegen_flags: <defaults>
</compile_context>

<pallas_src>
import functools

import jax
import jax.numpy as jnp
from jax.experimental import pallas as pl
from jax.experimental.pallas import tpu as pltpu


def _round_up(x, m):
    return (x + m - 1) // m * m


def _pick_row_tile(m, tm_max):
    """Row tile: as large as possible (amortize per-grid-step overhead) but
    keep >= ~8 grid steps once M is big enough so v7x's two TensorCores
    (grid axis marked "parallel") both stay busy."""
    tm = min(tm_max, _round_up(m, 8))
    min_steps = 8
    if m >= min_steps * 128:
        tm = min(tm, _round_up(pl.cdiv(m, min_steps), 8))
    return max(8, tm)


def _proj_kernel(x_ref, w_ref, b_ref, o_ref):
    # x_ref: (tm, K)  row tile of flattened patches (compute dtype)
    # w_ref: (K, E)   projection weight, grid-invariant (compute dtype)
    # b_ref: (1, E)   bias, grid-invariant (f32)
    # o_ref: (tm, E)
    acc = jnp.dot(x_ref[...], w_ref[...], preferred_element_type=jnp.float32)
    o_ref[...] = (acc + b_ref[...]).astype(o_ref.dtype)


def prepare_patch_embedding_params(weight, bias, compute_dtype=jnp.bfloat16):
    """Hoistable, once-per-training-run param prep.

    weight: (embed_dim, patch_dim) -- PyTorch nn.Linear layout.
    bias:   (embed_dim,)
    Returns (w_t, b_row): (patch_dim, embed_dim) in compute dtype and
    (1, embed_dim) f32.
    """
    w_t = jnp.asarray(weight).T.astype(compute_dtype)
    b_row = jnp.asarray(bias).astype(jnp.float32)[None, :]
    return w_t, b_row


def patch_embedding_prepared(x, w_t, b_row, patch_size, *,
                             out_dtype=None, tm=512):
    """PatchEmbedding forward with pre-transposed params.

    x:     (N, C, H, W) NCHW image batch.
    w_t:   (patch_dim, embed_dim) projection weight (already transposed/cast).
    b_row: (1, embed_dim) f32 bias.
    Returns (N, num_patches, embed_dim) in out_dtype (default: x.dtype).
    """
    N, C, H, W = x.shape
    p = patch_size
    assert H % p == 0 and W % p == 0, "image dims must be divisible by patch size"
    nh, nw = H // p, W // p
    num_patches = nh * nw
    patch_dim = C * p * p
    embed_dim = w_t.shape[1]
    assert w_t.shape[0] == patch_dim
    out_dtype = jnp.dtype(x.dtype if out_dtype is None else out_dtype)
    cdt = jnp.dtype(w_t.dtype)

    M = N * num_patches

    # ---- patch extraction: one fused XLA transpose (+ dtype cast), no pads ----
    # Flatten order (C, ph, pw) matches the nn.Linear / Conv2d-equivalent layout.
    patches = x.reshape(N, C, nh, p, nw, p).transpose(0, 2, 4, 1, 3, 5)
    patches = patches.reshape(M, patch_dim).astype(cdt)

    # ---- tiling: row grid only; K / E blocks are the full extents (no padding,
    # no post-kernel slice; Mosaic handles sub-128 K/E on the MXU) ----
    tm_eff = _pick_row_tile(M, tm)
    grid = (pl.cdiv(M, tm_eff),)

    itemsize = jnp.dtype(cdt).itemsize
    out_itemsize = out_dtype.itemsize

    # VMEM budget: double-buffered x/out tiles + (double-buffered) weight + bias.
    vmem_need = (2 * tm_eff * (patch_dim * itemsize + embed_dim * out_itemsize)
                 + 2 * patch_dim * embed_dim * itemsize
                 + 2 * embed_dim * 4)
    vmem_limit = int(min(48 * 1024 * 1024, max(2 * vmem_need, 32 * 1024 * 1024)))

    cost = pl.CostEstimate(
        flops=2 * M * patch_dim * embed_dim,
        transcendentals=0,
        bytes_accessed=(M * patch_dim + patch_dim * embed_dim) * itemsize
        + embed_dim * 4
        + M * embed_dim * out_itemsize,
    )

    out = pl.pallas_call(
        _proj_kernel,
        out_shape=jax.ShapeDtypeStruct((M, embed_dim), out_dtype),
        grid=grid,
        in_specs=[
            pl.BlockSpec((tm_eff, patch_dim), lambda i: (i, 0)),
            # Weight / bias: constant index_map -> fetched once, VMEM-resident.
            pl.BlockSpec((patch_dim, embed_dim), lambda i: (0, 0)),
            pl.BlockSpec((1, embed_dim), lambda i: (0, 0)),
        ],
        out_specs=pl.BlockSpec((tm_eff, embed_dim), lambda i: (i, 0)),
        compiler_params=pltpu.CompilerParams(
            dimension_semantics=("parallel",),
            vmem_limit_bytes=vmem_limit,
        ),
        cost_estimate=cost,
    )(patches, w_t, b_row)

    return out.reshape(N, num_patches, embed_dim)


def patch_embedding(x, weight, bias, patch_size, *,
                    compute_dtype=jnp.bfloat16, out_dtype=None, tm=512):
    """Convenience wrapper taking the raw PyTorch-layout nn.Linear params.

    weight: (embed_dim, patch_dim), bias: (embed_dim,).
    In a training loop, call prepare_patch_embedding_params() once and use
    patch_embedding_prepared() instead to avoid the per-call weight transpose.
    """
    w_t, b_row = prepare_patch_embedding_params(weight, bias, compute_dtype)
    return patch_embedding_prepared(x, w_t, b_row, patch_size,
                                    out_dtype=out_dtype, tm=tm)


if __name__ == "__main__":
    # Module config (small; in_channels=3 as in the module default).
    img_size = 16
    patch_size = 4
    in_channels = 3
    embed_dim = 32
    batch = 2

    num_patches = (img_size // patch_size) ** 2        # 16
    patch_dim = in_channels * patch_size * patch_size  # 48

    key = jax.random.PRNGKey(0)
    kx, kw, kb = jax.random.split(key, 3)

    # Input image, NCHW like PyTorch.
    x = jax.random.normal(kx, (batch, in_channels, img_size, img_size), jnp.float32)

    # Deterministic synthetic nn.Linear(patch_dim, embed_dim) params
    # (uniform(-1/sqrt(fan_in), 1/sqrt(fan_in)) like PyTorch's default init).
    bound = 1.0 / jnp.sqrt(jnp.float32(patch_dim))
    weight = jax.random.uniform(kw, (embed_dim, patch_dim), jnp.float32, -bound, bound)
    bias = jax.random.uniform(kb, (embed_dim,), jnp.float32, -bound, bound)

    # Pure-JAX reference (f32).
    p = patch_size
    ref_patches = x.reshape(batch, in_channels, img_size // p, p, img_size // p, p)
    ref_patches = ref_patches.transpose(0, 2, 4, 1, 3, 5).reshape(batch, num_patches, patch_dim)
    ref = ref_patches @ weight.T + bias

    fwd = jax.jit(
        functools.partial(patch_embedding, patch_size=patch_size),
        static_argnames=("compute_dtype", "out_dtype", "tm"),
    )

    # Default path: bf16 MXU inputs, f32 accumulation, f32 output (x.dtype).
    out = jax.block_until_ready(fwd(x, weight, bias))
    assert out.shape == (batch, num_patches, embed_dim), out.shape
    assert out.dtype == jnp.float32
    assert jnp.allclose(out, ref, atol=5e-2, rtol=5e-2)

    # f32 compute path (tight tolerance).
    out_f32 = jax.block_until_ready(fwd(x, weight, bias, compute_dtype=jnp.float32))
    assert out_f32.shape == (batch, num_patches, embed_dim), out_f32.shape
    assert jnp.allclose(out_f32, ref, atol=1e-5, rtol=1e-5)

    print("KERNEL_OK")
</pallas_src>

<mosaic_0001>
module attributes {stable_mosaic.version = 11 : i64} {
  func.func @_proj_kernel(%arg0: i32, %arg1: memref<32x48xbf16, #tpu.memory_space<vmem>>, %arg2: memref<48x32xbf16, #tpu.memory_space<vmem>>, %arg3: memref<1x32xf32, #tpu.memory_space<vmem>>, %arg4: memref<32x32xf32, #tpu.memory_space<vmem>>) attributes {dimension_semantics = [#tpu.dimension_semantics<parallel>], iteration_bounds = array<i64: 1>, scalar_prefetch = 0 : i64, scratch_operands = 0 : i64, tpu.core_type = #tpu.core_type<tc>, window_params = [{transform_indices = @transform_0, window_bounds = array<i64: 32, 48>}, {pipeline_mode = #tpu.pipeline_mode<synchronous>, transform_indices = @transform_1, window_bounds = array<i64: 48, 32>}, {pipeline_mode = #tpu.pipeline_mode<synchronous>, transform_indices = @transform_2, window_bounds = array<i64: 1, 32>}, {transform_indices = @transform_3, window_bounds = array<i64: 32, 32>}]} {
    %c0 = arith.constant 0 : index
    %c0_0 = arith.constant 0 : index
    %0 = vector.load %arg1[%c0, %c0_0] : memref<32x48xbf16, #tpu.memory_space<vmem>>, vector<32x48xbf16>
    %c0_1 = arith.constant 0 : index
    %c0_2 = arith.constant 0 : index
    %1 = vector.load %arg2[%c0_1, %c0_2] : memref<48x32xbf16, #tpu.memory_space<vmem>>, vector<48x32xbf16>
    %cst = arith.constant dense<0.000000e+00> : vector<32x32xf32>
    %2 = tpu.matmul %0, %1, %cst {dimension_numbers = #tpu.dot_dimension_numbers<[1], [0], [0], [1], [0, 0, 1, 1], [], []>} : vector<32x48xbf16>, vector<48x32xbf16>, vector<32x32xf32> -> vector<32x32xf32>
    %c0_3 = arith.constant 0 : index
    %c0_4 = arith.constant 0 : index
    %3 = vector.load %arg3[%c0_3, %c0_4] : memref<1x32xf32, #tpu.memory_space<vmem>>, vector<1x32xf32>
    %4 = vector.broadcast %3 : vector<1x32xf32> to vector<32x32xf32>
    %5 = arith.addf %2, %4 : vector<32x32xf32>
    %c0_5 = arith.constant 0 : index
    %c0_6 = arith.constant 0 : index
    %6 = vector.load %arg4[%c0_5, %c0_6] : memref<32x32xf32, #tpu.memory_space<vmem>>, vector<32x32xf32>
    tpu.vector_store %arg4[%c0_5, %c0_6], %5 {strides = array<i32>} : memref<32x32xf32, #tpu.memory_space<vmem>>, vector<32x32xf32>,
    return
  }
  func.func @transform_0(%arg0: i32) -> (i32, i32) {
    %c0_i32 = arith.constant 0 : i32
    %c0_i32_0 = arith.constant 0 : i32
    return %arg0, %c0_i32 : i32, i32
  }
  func.func @transform_1(%arg0: i32) -> (i32, i32) {
    %c0_i32 = arith.constant 0 : i32
    %c0_i32_0 = arith.constant 0 : i32
    %c0_i32_1 = arith.constant 0 : i32
    return %c0_i32, %c0_i32_0 : i32, i32
  }
  func.func @transform_2(%arg0: i32) -> (i32, i32) {
    %c0_i32 = arith.constant 0 : i32
    %c0_i32_0 = arith.constant 0 : i32
    %c0_i32_1 = arith.constant 0 : i32
    return %c0_i32, %c0_i32_0 : i32, i32
  }
  func.func @transform_3(%arg0: i32) -> (i32, i32) {
    %c0_i32 = arith.constant 0 : i32
    %c0_i32_0 = arith.constant 0 : i32
    return %arg0, %c0_i32 : i32, i32
  }
}

</mosaic_0001>

<llo_original>
// kernel: patch_embedding.1
$region0: #{patch_embedding.1}
  #allocation0 [shape = 'u32[]', space=smem, size = 0x4, offset = 0x4, fixed_abs, tag = 'smem constant byte address 0x4 - core index']
  #allocation1 [shape = 'u32[144,128]{1,0:T(1,128)}', space=vmem, size = 0x12000, scoped, tag = 'internal scratch']
  %s0 = inlined_call_operand.vmem [shape: bf16[32,48], index: 0, kind: input, shape index: {}]
  %s1 = inlined_call_operand.vmem [shape: bf16[48,32], index: 1, kind: input, shape index: {}]
  %s2 = inlined_call_operand.vmem [shape: f32[1,32], index: 2, kind: input, shape index: {}]
  %s3 = inlined_call_operand.hbm [shape: f32[32,32], index: 3, kind: output, shape index: {}]
  %s4 = sld [smem:[#allocation0]]
  $region22: #{patch_embedding.1} parent=0
    _
  %s6 = ssub.s32 1, %s4
  %s7 = scalar_select 0, %s6, %s4
  $region1: #{patch_embedding.1} parent=0
    #allocation2 [shape = 'u8[16384]{0}', space=vmem, size = 0x4000, scoped, tag = 'output window, operand 0, single buffered']
    #allocation3 [shape = 's32[1]{0}', space=sflag, size = 0x4, scoped, tag = 'scoped memory for patch_embedding.1']
    %8 = vsyncpa [#allocation3], 0
    // Predicated region
    $region2: #{patch_embedding.1} parent=1 // pred_check
      _
    $region3: #{patch_embedding.1} parent=1 // pred_check_branch
      %10 = sbr.rel (0) target = $region5
    $region4: #{patch_embedding.1} parent=1 // pred_region
      _
    $region5: #{patch_embedding.1} parent=1 // pred_fallthru
      _
    // Predicated region
    $region6: #{patch_embedding.1} parent=1 // pred_check
      _
    $region7: #{patch_embedding.1} parent=1 // pred_check_branch
      %12 = sbr.rel (0) target = $region9
    $region8: #{patch_embedding.1} parent=1 // pred_region
      _
    $region9: #{patch_embedding.1} parent=1 // pred_fallthru
      _
    // Predicated region
    $region10: #{patch_embedding.1} parent=1 // pred_check
      _
    $region11: #{patch_embedding.1} parent=1 // pred_check_branch
      %14 = sbr.rel (0) target = $region13
    $region12: #{patch_embedding.1} parent=1 // pred_region
      _
    $region13: #{patch_embedding.1} parent=1 // pred_fallthru
      _
    %v16 = vld [vmem:[%s0] sm:$0xf]
    %v17 = vld [vmem:[%s0 + $0x4] sm:$0xf]
    %v18 = vld [vmem:[%s0 + $0x8] sm:$0xf]
    %v19 = vld [vmem:[%s0 + $0xc] sm:$0xf]
    %v20 = vld [vmem:[%s1] sm:$0xf]
    %v21 = vld [vmem:[%s1 + $0x4] sm:$0xf]
    %v22 = vld [vmem:[%s1 + $0x8] sm:$0xf]
    %v23 = vld [vmem:[%s1 + $0xc] sm:$0xf]
    %v24 = vld [vmem:[%s1 + $0x10] sm:$0xf]
    %v25 = vld [vmem:[%s1 + $0x14] sm:$0xf]
    %v26 = vld [vmem:[%s2] sm:$0x1]
    %v28 = vlaneseq
    %v29 = vshrl.u32 %v28, 7
    %v30 = vsub.s32 0, %v29
    %v31 = vrot.slane %v26, %v30
    %v37 = vunpack.c.l.b16 %v16
    %v38 = vunpack.c.l.b16 %v17
    %v39 = vunpack.c.l.b16 %v18
    %v40 = vunpack.c.l.b16 %v19
    %v41 = vpack.c.b16 %v38, %v37
    %v42 = vpack.c.b16 %v40, %v39
    %v49 = vunpack.c.l.b16 %v20
    %v50 = vunpack.c.l.b16 %v21
    %v51 = vunpack.c.l.b16 %v22
    %v52 = vunpack.c.l.b16 %v23
    %v53 = vunpack.c.l.b16 %v24
    %v54 = vunpack.c.l.b16 %v25
    %v55 = vpack.c.b16 %v50, %v49
    %v56 = vpack.c.b16 %v52, %v51
    %v57 = vpack.c.b16 %v54, %v53
    %vm61 = vcmask 392192
    %v63 = vsel %vm61, %v41, 0
    %v66 = vsel %vm61, %v42, 0
    %68 = vmatprep.subr.bf16.mxu0 0
    %69 = vmatpush1.bf16.msra.mxu0 %v55
    %70 = vmatprep.subr.bf16.mxu0 0
    %71 = vmatpush1.bf16.msra.mxu0 %v56
    %72 = vmatprep.subr.bf16.mxu0 0
    %73 = vmatpush1.bf16.msra.mxu0 %v57
    %74 = vmatprep.subr.bf16.mxu0 0
    %75 = vmatpush1.bf16.msra.mxu0 0
    %76 = vmatprep.subr.bf16.mxu0 0
    %77 = vmatpush1.bf16.msra.mxu0 0
    %78 = vmatprep.subr.bf16.mxu0 0
    %79 = vmatpush1.bf16.msra.mxu0 0
    %80 = vmatprep.subr.bf16.mxu0 0
    %81 = vmatpush1.bf16.msra.mxu0 0
    %82 = vmatprep.subr.bf16.mxu0 0
    %83 = vmatpush1.bf16.msra.mxu0 0
    %84 = vmatprep.subr.bf16.mxu0 0
    %85 = vmatpush1.bf16.msra.mxu0 0
    %86 = vmatprep.subr.bf16.mxu0 0
    %87 = vmatpush1.bf16.msra.mxu0 0
    %88 = vmatprep.subr.bf16.mxu0 0
    %89 = vmatpush1.bf16.msra.mxu0 0
    %90 = vmatprep.subr.bf16.mxu0 0
    %91 = vmatpush1.bf16.msra.mxu0 0
    %92 = vmatprep.subr.bf16.mxu0 0
    %93 = vmatpush1.bf16.msra.mxu0 0
    %94 = vmatprep.subr.bf16.mxu0 0
    %95 = vmatpush1.bf16.msra.mxu0 0
    %96 = vmatprep.subr.bf16.mxu0 0
    %97 = vmatpush1.bf16.msra.mxu0 0
    %98 = vmatprep.subr.bf16.mxu0 0
    %99 = vmatpush1.bf16.msra.mxu0 0
    %100 = vmatprep.mubr.bf16.mxu0 0
    %101 = vmatmul.mubr.bf16.gmra.mrb[0].mxu0 %v63
    %v102 = vpop.f32.mrb[0].mxu0
    %v103 = vadd.f32 %v31, %v102
    %v104 = vpop.f32.mrb[0].mxu0
    %v105 = vpop.f32.mrb[0].mxu0
    %v106 = vadd.f32 %v31, %v105
    %v107 = vpop.f32.mrb[0].mxu0
    %108 = vmatprep.mubr.bf16.mxu0 0
    %109 = vmatmul.mubr.bf16.gmra.mrb[0].mxu0 %v66
    %v110 = vpop.f32.mrb[0].mxu0
    %v111 = vadd.f32 %v31, %v110
    %v112 = vpop.f32.mrb[0].mxu0
    %v113 = vpop.f32.mrb[0].mxu0
    %v114 = vadd.f32 %v31, %v113
    %v115 = vpop.f32.mrb[0].mxu0
    %116 = vdwg.mxu0
    %vm117 = vcmask 261120
    %118 = vst.msk [vmem:[#allocation2] sm:$0xff] %vm117, %v103
    %119 = vst.msk [vmem:[#allocation2 + $0x8] sm:$0xff] %vm117, %v106
    %120 = vst.msk [vmem:[#allocation2 + $0x10] sm:$0xff] %vm117, %v111
    %121 = vst.msk [vmem:[#allocation2 + $0x18] sm:$0xff] %vm117, %v114
    // Predicated region
    $region14: #{patch_embedding.1} parent=1 // pred_check
      _
    $region15: #{patch_embedding.1} parent=1 // pred_check_branch
      %123 = sbr.rel (0) target = $region17
    $region16: #{patch_embedding.1} parent=1 // pred_region
      %s125 = ssub.s32 512, 512
      %126 = vsyncadd [#allocation3], %s125
      %s127 = sshll.u32 [#allocation2], 4
      %s128 = int_to_ptr.vmem [resolvable:$true] %s127
      %133 = dma.vmem_to_hbm [thread:$0]  %s128, 512, %s3, [#allocation3], 128, 128, 8
    $region17: #{patch_embedding.1} parent=1 // pred_fallthru
      _
    // Predicated region
    $region18: #{patch_embedding.1} parent=1 // pred_check
      _
    $region19: #{patch_embedding.1} parent=1 // pred_check_branch
      %135 = sbr.rel (0) target = $region21
    $region20: #{patch_embedding.1} parent=1 // pred_region
      %136 = dma.done [#allocation3], 512
    $region21: #{patch_embedding.1} parent=1 // pred_fallthru
      _
    %137 = vsyncpa [#allocation3], 1

</llo_original>
